<compile_context>
chip_gen: v5e
topology: v5e:2x2
jax: 0.10.0
libtpu: 0.0.40
codegen_flags: <defaults>
</compile_context>

<pallas_src>
import functools
import math

import jax
import jax.numpy as jnp
from jax.experimental import pallas as pl
from jax.experimental.pallas import tpu as pltpu


def _round_up(x: int, m: int) -> int:
    return ((x + m - 1) // m) * m


def _cdiv(a: int, b: int) -> int:
    return (a + b - 1) // b


@functools.lru_cache(maxsize=1)
def _vmem_capacity_bytes() -> int:
    """Per-TensorCore VMEM capacity; conservative fallback (v7x) if unknown."""
    try:
        return int(pltpu.get_tpu_info().vmem_capacity_bytes)
    except Exception:
        return 64 * 1024 * 1024


def _pack_factor(d_in: int, d_out: int, lane: int = 128) -> int:
    """Smallest p such that p*d_in and p*d_out are multiples of the 128 lanes."""
    p_in = lane // math.gcd(lane, d_in)
    p_out = lane // math.gcd(lane, d_out)
    p = (p_in * p_out) // math.gcd(p_in, p_out)
    return p if p <= 8 else 1


def _vmem_footprint(bm, d_in_k, hidden_k, d_out_k, act_bytes, weight_bytes):
    return (2 * weight_bytes                    # resident weights (worst case 2 bufs)
            + 2 * bm * d_in_k * act_bytes       # x tiles, double-buffered
            + 2 * bm * d_out_k * act_bytes      # out tiles, double-buffered
            + bm * hidden_k * 4                 # f32 intermediate h
            + bm * d_out_k * 4)                 # f32 intermediate out (pre-cast)


def _choose_block_m(block_m, m_rows, d_in_k, hidden_k, d_out_k, act_bytes,
                    weight_bytes, budget):
    """Largest sublane-aligned M tile that fits the VMEM budget, capped so that
    the grid has >= 2 steps (keeps both v7x TensorCores busy)."""
    m_align = max(8, 32 // act_bytes)           # f32 -> 8, bf16 -> 16, int8 -> 32
    bm = max(m_align, min(_round_up(block_m, m_align), _round_up(m_rows, m_align)))
    if m_rows >= 2 * m_align:
        bm = min(bm, _round_up(_cdiv(m_rows, 2), m_align))
    while bm > m_align and _vmem_footprint(
            bm, d_in_k, hidden_k, d_out_k, act_bytes, weight_bytes) > budget:
        bm = max(m_align, _round_up(bm // 2, m_align))
    return bm


def _mlp_kernel(x_ref, w1_ref, b1_ref, w2_ref, b2_ref, o_ref, *, compute_dtype):
    cdt1 = compute_dtype if compute_dtype is not None else w1_ref.dtype
    cdt2 = compute_dtype if compute_dtype is not None else w2_ref.dtype
    # fc1 on the MXU, f32 accumulation.
    h = jnp.dot(x_ref[...].astype(cdt1), w1_ref[...].astype(cdt1),
                preferred_element_type=jnp.float32)
    # bias + ReLU stay on the f32 accumulator (VPU).
    h = h + b1_ref[...].astype(jnp.float32)
    h = jnp.maximum(h, 0.0)
    # drop1: drop_ratio == 0.0 -> identity.
    out = jnp.dot(h.astype(cdt2), w2_ref[...].astype(cdt2),
                  preferred_element_type=jnp.float32)
    out = out + b2_ref[...].astype(jnp.float32)
    # drop2: drop_ratio == 0.0 -> identity.
    o_ref[...] = out.astype(o_ref.dtype)


@functools.partial(jax.jit, static_argnames=("block_m", "compute_dtype"))
def mlp_pallas(x, w1, b1, w2, b2, *, block_m=4096, compute_dtype=None):
    """x: (B, S, D_in) -> (B, S, D_out).
    w1:(D_in, H), b1:(H,), w2:(H, D_out), b2:(D_out,) (transposed vs nn.Linear)."""
    B, S, D_in = x.shape
    hidden = w1.shape[1]
    D_out = w2.shape[1]
    M = B * S

    act_bytes = jnp.dtype(x.dtype).itemsize
    m_align = max(8, 32 // act_bytes)

    capacity = _vmem_capacity_bytes()
    budget = int(capacity * 0.70)               # ~45 MiB on v7x, ~90 MiB on v5e/v6e

    # ---- Lane-dense block-diagonal repack -----------------------------------
    def packed_weight_bytes(pp):
        return ((pp * D_in * pp * hidden + pp * hidden) * jnp.dtype(w1.dtype).itemsize
                + (pp * hidden * pp * D_out + pp * D_out) * jnp.dtype(w2.dtype).itemsize)

    p = _pack_factor(D_in, D_out)
    if p > 1 and 2 * packed_weight_bytes(p) > budget // 2:
        p = 1                                   # repacked weights would be too big

    d_in_k, hidden_k, d_out_k = p * D_in, p * hidden, p * D_out
    weight_bytes = packed_weight_bytes(p)

    if p > 1:
        # NOTE: in a real model these would be precomputed once outside the call.
        w1k = jnp.kron(jnp.eye(p, dtype=w1.dtype), w1)   # (p*D_in, p*H)
        w2k = jnp.kron(jnp.eye(p, dtype=w2.dtype), w2)   # (p*H, p*D_out)
        b1k = jnp.tile(b1, p)
        b2k = jnp.tile(b2, p)
    else:
        w1k, b1k, w2k, b2k = w1, b1, w2, b2
    b1k = b1k.reshape(1, hidden_k)
    b2k = b2k.reshape(1, d_out_k)

    # Flatten tokens; pad only to the small pack*sublane alignment (NOT to a
    # multiple of the large M tile) - the ceil-div grid handles the ragged tail.
    x2d = x.reshape(M, D_in)
    row_align = p * m_align
    M_pad = _round_up(M, row_align)
    if M_pad != M:
        x2d = jnp.pad(x2d, ((0, M_pad - M), (0, 0)))
    Mk = M_pad // p
    xk = x2d.reshape(Mk, d_in_k)                # free row-major repack

    # ---- Tiling --------------------------------------------------------------
    bm = _choose_block_m(block_m, Mk, d_in_k, hidden_k, d_out_k, act_bytes,
                         weight_bytes, budget)
    grid = (_cdiv(Mk, bm),)

    footprint = _vmem_footprint(bm, d_in_k, hidden_k, d_out_k, act_bytes,
                                weight_bytes)
    vmem_limit = int(min(max(2 * footprint, 32 * 1024 * 1024),
                         int(capacity * 0.9)))

    # Advisory cost estimate for XLA's scheduler.
    flops = 2 * M * hidden * (D_in + D_out)
    bytes_accessed = M * (D_in + D_out) * act_bytes + weight_bytes

    kernel = functools.partial(_mlp_kernel, compute_dtype=compute_dtype)

    out_k = pl.pallas_call(
        kernel,
        out_shape=jax.ShapeDtypeStruct((Mk, d_out_k), x.dtype),
        grid_spec=pltpu.PrefetchScalarGridSpec(
            num_scalar_prefetch=0,
            grid=grid,
            in_specs=[
                pl.BlockSpec((bm, d_in_k), lambda i: (i, 0)),        # x tile
                pl.BlockSpec((d_in_k, hidden_k), lambda i: (0, 0)),  # W1 (resident)
                pl.BlockSpec((1, hidden_k), lambda i: (0, 0)),       # b1
                pl.BlockSpec((hidden_k, d_out_k), lambda i: (0, 0)), # W2 (resident)
                pl.BlockSpec((1, d_out_k), lambda i: (0, 0)),        # b2
            ],
            out_specs=pl.BlockSpec((bm, d_out_k), lambda i: (i, 0)),
        ),
        compiler_params=pltpu.CompilerParams(
            dimension_semantics=("parallel",),
            vmem_limit_bytes=vmem_limit,
        ),
        cost_estimate=pl.CostEstimate(
            flops=flops, transcendentals=0, bytes_accessed=bytes_accessed),
    )(xk, w1k, b1k, w2k, b2k)

    out2d = out_k.reshape(M_pad, D_out)
    if M_pad != M:
        out2d = out2d[:M]
    return out2d.reshape(B, S, D_out)


def _reference_mlp(x, w1, b1, w2, b2):
    hi = jax.lax.Precision.HIGHEST
    h = jnp.maximum(jnp.dot(x, w1, precision=hi) + b1, 0.0)
    return jnp.dot(h, w2, precision=hi) + b2


if __name__ == "__main__":
    # Module config: in_dim=32, act="relu", hidden_dim=128, out_dim=32,
    # bias=True, drop_ratio=0.0.
    B, S = 2, 8
    in_dim, hidden_dim, out_dim = 32, 128, 32

    key = jax.random.PRNGKey(0)
    kx, k1, k2, k3, k4 = jax.random.split(key, 5)

    x = jax.random.normal(kx, (B, S, in_dim), dtype=jnp.float32)
    # Params match nn.Linear, stored transposed (features on the lane axis).
    w1 = jax.random.normal(k1, (in_dim, hidden_dim), dtype=jnp.float32) * 0.02
    b1 = jax.random.normal(k2, (hidden_dim,), dtype=jnp.float32) * 0.02
    w2 = jax.random.normal(k3, (hidden_dim, out_dim), dtype=jnp.float32) * 0.02
    b2 = jax.random.normal(k4, (out_dim,), dtype=jnp.float32) * 0.02

    # f32 path.
    out = mlp_pallas(x, w1, b1, w2, b2)
    jax.block_until_ready(out)
    ref = _reference_mlp(x, w1, b1, w2, b2)
    assert out.shape == (B, S, out_dim)
    assert jnp.allclose(out, ref, atol=2e-3, rtol=2e-2), "f32 mismatch vs reference"

    # Ragged token count (B*S not a multiple of pack*align): exercises the pad
    # to the small row alignment + ceil-div grid.
    x_odd = jax.random.normal(kx, (3, 7, in_dim), dtype=jnp.float32)
    out_odd = mlp_pallas(x_odd, w1, b1, w2, b2)
    jax.block_until_ready(out_odd)
    ref_odd = _reference_mlp(x_odd, w1, b1, w2, b2)
    assert out_odd.shape == (3, 7, out_dim)
    assert jnp.allclose(out_odd, ref_odd, atol=2e-3, rtol=2e-2), "ragged mismatch"

    # bf16 streaming path (bf16 x/W on the MXU, f32 accumulation inside).
    out_bf16 = mlp_pallas(x.astype(jnp.bfloat16),
                          w1.astype(jnp.bfloat16), b1.astype(jnp.bfloat16),
                          w2.astype(jnp.bfloat16), b2.astype(jnp.bfloat16))
    jax.block_until_ready(out_bf16)
    assert jnp.allclose(out_bf16.astype(jnp.float32), ref, atol=5e-2, rtol=5e-2), \
        "bf16 mismatch vs f32 reference"

    print("KERNEL_OK")
</pallas_src>

<mosaic_0001>
module attributes {stable_mosaic.version = 11 : i64} {
  func.func @_mlp_kernel(%arg0: i32, %arg1: memref<8x128xf32, #tpu.memory_space<vmem>>, %arg2: memref<128x512xf32, #tpu.memory_space<vmem>>, %arg3: memref<1x512xf32, #tpu.memory_space<vmem>>, %arg4: memref<512x128xf32, #tpu.memory_space<vmem>>, %arg5: memref<1x128xf32, #tpu.memory_space<vmem>>, %arg6: memref<8x128xf32, #tpu.memory_space<vmem>>) attributes {dimension_semantics = [#tpu.dimension_semantics<parallel>], iteration_bounds = array<i64: 1>, scalar_prefetch = 0 : i64, scratch_operands = 0 : i64, tpu.core_type = #tpu.core_type<tc>, window_params = [{transform_indices = @transform_0, window_bounds = array<i64: 8, 128>}, {pipeline_mode = #tpu.pipeline_mode<synchronous>, transform_indices = @transform_1, window_bounds = array<i64: 128, 512>}, {pipeline_mode = #tpu.pipeline_mode<synchronous>, transform_indices = @transform_2, window_bounds = array<i64: 1, 512>}, {pipeline_mode = #tpu.pipeline_mode<synchronous>, transform_indices = @transform_3, window_bounds = array<i64: 512, 128>}, {pipeline_mode = #tpu.pipeline_mode<synchronous>, transform_indices = @transform_4, window_bounds = array<i64: 1, 128>}, {transform_indices = @transform_5, window_bounds = array<i64: 8, 128>}]} {
    %c0 = arith.constant 0 : index
    %c0_0 = arith.constant 0 : index
    %0 = vector.load %arg1[%c0, %c0_0] : memref<8x128xf32, #tpu.memory_space<vmem>>, vector<8x128xf32>
    %c0_1 = arith.constant 0 : index
    %c0_2 = arith.constant 0 : index
    %1 = vector.load %arg2[%c0_1, %c0_2] : memref<128x512xf32, #tpu.memory_space<vmem>>, vector<128x512xf32>
    %cst = arith.constant dense<0.000000e+00> : vector<8x512xf32>
    %2 = tpu.matmul %0, %1, %cst {dimension_numbers = #tpu.dot_dimension_numbers<[1], [0], [0], [1], [0, 0, 1, 1], [], []>} : vector<8x128xf32>, vector<128x512xf32>, vector<8x512xf32> -> vector<8x512xf32>
    %c0_3 = arith.constant 0 : index
    %c0_4 = arith.constant 0 : index
    %3 = vector.load %arg3[%c0_3, %c0_4] : memref<1x512xf32, #tpu.memory_space<vmem>>, vector<1x512xf32>
    %4 = vector.broadcast %3 : vector<1x512xf32> to vector<8x512xf32>
    %5 = arith.addf %2, %4 : vector<8x512xf32>
    %cst_5 = arith.constant 0.000000e+00 : f32
    %6 = vector.broadcast %cst_5 : f32 to vector<8x512xf32>
    %7 = arith.maximumf %5, %6 : vector<8x512xf32>
    %c0_6 = arith.constant 0 : index
    %c0_7 = arith.constant 0 : index
    %8 = vector.load %arg4[%c0_6, %c0_7] : memref<512x128xf32, #tpu.memory_space<vmem>>, vector<512x128xf32>
    %cst_8 = arith.constant dense<0.000000e+00> : vector<8x128xf32>
    %9 = tpu.matmul %7, %8, %cst_8 {dimension_numbers = #tpu.dot_dimension_numbers<[1], [0], [0], [1], [0, 0, 1, 1], [], []>} : vector<8x512xf32>, vector<512x128xf32>, vector<8x128xf32> -> vector<8x128xf32>
    %c0_9 = arith.constant 0 : index
    %c0_10 = arith.constant 0 : index
    %10 = vector.load %arg5[%c0_9, %c0_10] : memref<1x128xf32, #tpu.memory_space<vmem>>, vector<1x128xf32>
    %11 = vector.broadcast %10 : vector<1x128xf32> to vector<8x128xf32>
    %12 = arith.addf %9, %11 : vector<8x128xf32>
    %c0_11 = arith.constant 0 : index
    %c0_12 = arith.constant 0 : index
    %13 = vector.load %arg6[%c0_11, %c0_12] : memref<8x128xf32, #tpu.memory_space<vmem>>, vector<8x128xf32>
    tpu.vector_store %arg6[%c0_11, %c0_12], %12 {strides = array<i32>} : memref<8x128xf32, #tpu.memory_space<vmem>>, vector<8x128xf32>,
    return
  }
  func.func @transform_0(%arg0: i32) -> (i32, i32) {
    %c0_i32 = arith.constant 0 : i32
    %c0_i32_0 = arith.constant 0 : i32
    return %arg0, %c0_i32 : i32, i32
  }
  func.func @transform_1(%arg0: i32) -> (i32, i32) {
    %c0_i32 = arith.constant 0 : i32
    %c0_i32_0 = arith.constant 0 : i32
    %c0_i32_1 = arith.constant 0 : i32
    return %c0_i32, %c0_i32_0 : i32, i32
  }
  func.func @transform_2(%arg0: i32) -> (i32, i32) {
    %c0_i32 = arith.constant 0 : i32
    %c0_i32_0 = arith.constant 0 : i32
    %c0_i32_1 = arith.constant 0 : i32
    return %c0_i32, %c0_i32_0 : i32, i32
  }
  func.func @transform_3(%arg0: i32) -> (i32, i32) {
    %c0_i32 = arith.constant 0 : i32
    %c0_i32_0 = arith.constant 0 : i32
    %c0_i32_1 = arith.constant 0 : i32
    return %c0_i32, %c0_i32_0 : i32, i32
  }
  func.func @transform_4(%arg0: i32) -> (i32, i32) {
    %c0_i32 = arith.constant 0 : i32
    %c0_i32_0 = arith.constant 0 : i32
    %c0_i32_1 = arith.constant 0 : i32
    return %c0_i32, %c0_i32_0 : i32, i32
  }
  func.func @transform_5(%arg0: i32) -> (i32, i32) {
    %c0_i32 = arith.constant 0 : i32
    %c0_i32_0 = arith.constant 0 : i32
    return %arg0, %c0_i32 : i32, i32
  }
}

</mosaic_0001>

<llo_original>
// kernel: tile.17
$region0: #{tile.17}
  #allocation0 [shape = 's32[1]{0}', space=sflag, size = 0x4, scoped, tag = 'scoped memory for tile.17']
  %s0 = inlined_call_operand.vmem [shape: f32[32], index: 0, kind: input, shape index: {}]
  %s1 = inlined_call_operand.vmem [shape: f32[4,32], index: 1, kind: output, shape index: {}]
  // Predicated region
  $region2: #{tile.17} parent=0 // pred_check
    _
  $region3: #{tile.17} parent=0 // pred_check_branch
    %3 = sbr.rel (0) target = $region5
  $region4: #{tile.17} parent=0 // pred_region
    _
  $region5: #{tile.17} parent=0 // pred_fallthru
    _
  %v4 = vld [vmem:[%s0] ss:$0 sm:$0xff]
  %5 = vst [vmem:[%s1] sm:$0xf] %v4

// kernel: tile.19
$region0: #{tile.19}
  %s0 = inlined_call_operand.vmem [shape: f32[4,32], index: 0, kind: input, shape index: {}]
  %s1 = inlined_call_operand.vmem [shape: f32[1,128], index: 1, kind: output, shape index: {}]
  $region1: #{tile.19} parent=0
    #allocation0 [shape = 'u8[4096]{0}', space=vmem, size = 0x1000, scoped, tag = 'scoped mem for output reshape']
    #allocation1 [shape = 'u8[4096]{0}', space=vmem, size = 0x1000, scoped, tag = 'scoped mem for input reshape']
    %s3 = ssub.s32 16, 1
    %v4 = vld [vmem:[%s0] sm:%s3]
    %5 = vst [vmem:[#allocation1] sm:%s3] %v4
    %v6 = vld [vmem:[#allocation1] sm:$0x1]
    %vm7 = vcmask 261120
    %8 = vst.msk [vmem:[#allocation0] sm:$0x1] %vm7, %v6
    %s9 = scalar_lea.vmem [#allocation1], 3
    %v10 = vld [vmem:[%s9] sm:$0x1]
    %11 = vrot.lane.b32.xlu0 %v10, 96
    %v12 = vpop.permute.xlu0 %11
    %vm13 = vcmask 1048320
    %14 = vst.msk [vmem:[#allocation0] sm:$0x1] %vm13, %v12
    %s15 = scalar_lea.vmem [#allocation1], 2
    %v16 = vld [vmem:[%s15] sm:$0x1]
    %17 = vrot.lane.b32.xlu0 %v16, 64
    %v18 = vpop.permute.xlu0 %17
    %vm19 = vcmask 785920
    %20 = vst.msk [vmem:[#allocation0] sm:$0x1] %vm19, %v18
    %s21 = scalar_lea.vmem [#allocation1], 1
    %v22 = vld [vmem:[%s21] sm:$0x1]
    %23 = vrot.lane.b32.xlu0 %v22, 32
    %v24 = vpop.permute.xlu0 %23
    %vm25 = vcmask 523520
    %26 = vst.msk [vmem:[#allocation0] sm:$0x1] %vm25, %v24
    %s28 = ssub.s32 2, 1
    %v29 = vld [vmem:[#allocation0] sm:%s28]
    %s31 = ssub.s32 2, 1
    %32 = vst [vmem:[%s1] sm:%s31] %v29

// kernel: tile.13
$region0: #{tile.13}
  #allocation0 [shape = 's32[1]{0}', space=sflag, size = 0x4, scoped, tag = 'scoped memory for tile.13']
  %s0 = inlined_call_operand.vmem [shape: f32[128], index: 0, kind: input, shape index: {}]
  %s1 = inlined_call_operand.vmem [shape: f32[4,128], index: 1, kind: output, shape index: {}]
  // Predicated region
  $region2: #{tile.13} parent=0 // pred_check
    _
  $region3: #{tile.13} parent=0 // pred_check_branch
    %3 = sbr.rel (0) target = $region5
  $region4: #{tile.13} parent=0 // pred_region
    _
  $region5: #{tile.13} parent=0 // pred_fallthru
    _
  %v4 = vld [vmem:[%s0] ss:$0 sm:$0xff]
  %5 = vst [vmem:[%s1] sm:$0xf] %v4

// kernel: mlp_pallas.1
$region0: #{mlp_pallas.1}
  #allocation0 [shape = 'u32[]', space=smem, size = 0x4, offset = 0x4, fixed_abs, tag = 'smem constant byte address 0x4 - core index']
  #allocation1 [shape = 'u32[72,128]{1,0:T(1,128)}', space=vmem, size = 0x9000, scoped, tag = 'internal scratch']
  %s0 = inlined_call_operand.vmem [shape: f32[8,128], index: 0, kind: input, shape index: {}]
  %s1 = inlined_call_operand.vmem [shape: f32[128,512], index: 1, kind: input, shape index: {}]
  %s2 = inlined_call_operand.vmem [shape: f32[1,512], index: 2, kind: input, shape index: {}]
  %s3 = inlined_call_operand.vmem [shape: f32[512,128], index: 3, kind: input, shape index: {}]
  %s4 = inlined_call_operand.vmem [shape: f32[1,128], index: 4, kind: input, shape index: {}]
  %s5 = inlined_call_operand.vmem [shape: f32[8,128], index: 5, kind: output, shape index: {}]
  %s6 = sld [smem:[#allocation0]]
  $region30: #{mlp_pallas.1} parent=0
    _
  %s8 = ssub.s32 1, %s6
  %s9 = scalar_select 0, %s8, %s6
  // Predicated region
  $region2: #{mlp_pallas.1} parent=0 // pred_check
    _
  $region3: #{mlp_pallas.1} parent=0 // pred_check_branch
    %11 = sbr.rel (0) target = $region5
  $region4: #{mlp_pallas.1} parent=0 // pred_region
    _
  $region5: #{mlp_pallas.1} parent=0 // pred_fallthru
    _
  // Predicated region
  $region6: #{mlp_pallas.1} parent=0 // pred_check
    _
  $region7: #{mlp_pallas.1} parent=0 // pred_check_branch
    %13 = sbr.rel (0) target = $region9
  $region8: #{mlp_pallas.1} parent=0 // pred_region
    _
  $region9: #{mlp_pallas.1} parent=0 // pred_fallthru
    _
  // Predicated region
  $region10: #{mlp_pallas.1} parent=0 // pred_check
    _
  $region11: #{mlp_pallas.1} parent=0 // pred_check_branch
    %15 = sbr.rel (0) target = $region13
  $region12: #{mlp_pallas.1} parent=0 // pred_region
    _
  $region13: #{mlp_pallas.1} parent=0 // pred_fallthru
    _
  // Predicated region
  $region14: #{mlp_pallas.1} parent=0 // pred_check
    _
  $region15: #{mlp_pallas.1} parent=0 // pred_check_branch
    %17 = sbr.rel (0) target = $region17
  $region16: #{mlp_pallas.1} parent=0 // pred_region
    _
  $region17: #{mlp_pallas.1} parent=0 // pred_fallthru
    _
  // Predicated region
  $region18: #{mlp_pallas.1} parent=0 // pred_check
    _
  $region19: #{mlp_pallas.1} parent=0 // pred_check_branch
    %19 = sbr.rel (0) target = $region21
  $region20: #{mlp_pallas.1} parent=0 // pred_region
    _
  $region21: #{mlp_pallas.1} parent=0 // pred_fallthru
    _
  %v20 = vld [vmem:[%s0] sm:$0xff]
  %v21 = vld [vmem:[%s1] sm:$0xff]
  %v22 = vld [vmem:[%s1 + $0x8] sm:$0xff]
  %v23 = vld [vmem:[%s1 + $0x10] sm:$0xff]
  %v24 = vld [vmem:[%s1 + $0x18] sm:$0xff]
  %v25 = vld [vmem:[%s1 + $0x20] sm:$0xff]
  %v26 = vld [vmem:[%s1 + $0x28] sm:$0xff]
  %v27 = vld [vmem:[%s1 + $0x30] sm:$0xff]
  %v28 = vld [vmem:[%s1 + $0x38] sm:$0xff]
  %v29 = vld [vmem:[%s1 + $0x40] sm:$0xff]
  %v30 = vld [vmem:[%s1 + $0x48] sm:$0xff]
  %v31 = vld [vmem:[%s1 + $0x50] sm:$0xff]
  %v32 = vld [vmem:[%s1 + $0x58] sm:$0xff]
  %v33 = vld [vmem:[%s1 + $0x60] sm:$0xff]
  %v34 = vld [vmem:[%s1 + $0x68] sm:$0xff]
  %v35 = vld [vmem:[%s1 + $0x70] sm:$0xff]
  %v36 = vld [vmem:[%s1 + $0x78] sm:$0xff]
  %v37 = vld [vmem:[%s1 + $0x80] sm:$0xff]
  %v38 = vld [vmem:[%s1 + $0x88] sm:$0xff]
  %v39 = vld [vmem:[%s1 + $0x90] sm:$0xff]
  %v40 = vld [vmem:[%s1 + $0x98] sm:$0xff]
  %v41 = vld [vmem:[%s1 + $0xa0] sm:$0xff]
  %v42 = vld [vmem:[%s1 + $0xa8] sm:$0xff]
  %v43 = vld [vmem:[%s1 + $0xb0] sm:$0xff]
  %v44 = vld [vmem:[%s1 + $0xb8] sm:$0xff]
  %v45 = vld [vmem:[%s1 + $0xc0] sm:$0xff]
  %v46 = vld [vmem:[%s1 + $0xc8] sm:$0xff]
  %v47 = vld [vmem:[%s1 + $0xd0] sm:$0xff]
  %v48 = vld [vmem:[%s1 + $0xd8] sm:$0xff]
  %v49 = vld [vmem:[%s1 + $0xe0] sm:$0xff]
  %v50 = vld [vmem:[%s1 + $0xe8] sm:$0xff]
  %v51 = vld [vmem:[%s1 + $0xf0] sm:$0xff]
  %v52 = vld [vmem:[%s1 + $0xf8] sm:$0xff]
  %v53 = vld [vmem:[%s1 + $0x100] sm:$0xff]
  %v54 = vld [vmem:[%s1 + $0x108] sm:$0xff]
  %v55 = vld [vmem:[%s1 + $0x110] sm:$0xff]
  %v56 = vld [vmem:[%s1 + $0x118] sm:$0xff]
  %v57 = vld [vmem:[%s1 + $0x120] sm:$0xff]
  %v58 = vld [vmem:[%s1 + $0x128] sm:$0xff]
  %v59 = vld [vmem:[%s1 + $0x130] sm:$0xff]
  %v60 = vld [vmem:[%s1 + $0x138] sm:$0xff]
  %v61 = vld [vmem:[%s1 + $0x140] sm:$0xff]
  %v62 = vld [vmem:[%s1 + $0x148] sm:$0xff]
  %v63 = vld [vmem:[%s1 + $0x150] sm:$0xff]
  %v64 = vld [vmem:[%s1 + $0x158] sm:$0xff]
  %v65 = vld [vmem:[%s1 + $0x160] sm:$0xff]
  %v66 = vld [vmem:[%s1 + $0x168] sm:$0xff]
  %v67 = vld [vmem:[%s1 + $0x170] sm:$0xff]
  %v68 = vld [vmem:[%s1 + $0x178] sm:$0xff]
  %v69 = vld [vmem:[%s1 + $0x180] sm:$0xff]
  %v70 = vld [vmem:[%s1 + $0x188] sm:$0xff]
  %v71 = vld [vmem:[%s1 + $0x190] sm:$0xff]
  %v72 = vld [vmem:[%s1 + $0x198] sm:$0xff]
  %v73 = vld [vmem:[%s1 + $0x1a0] sm:$0xff]
  %v74 = vld [vmem:[%s1 + $0x1a8] sm:$0xff]
  %v75 = vld [vmem:[%s1 + $0x1b0] sm:$0xff]
  %v76 = vld [vmem:[%s1 + $0x1b8] sm:$0xff]
  %v77 = vld [vmem:[%s1 + $0x1c0] sm:$0xff]
  %v78 = vld [vmem:[%s1 + $0x1c8] sm:$0xff]
  %v79 = vld [vmem:[%s1 + $0x1d0] sm:$0xff]
  %v80 = vld [vmem:[%s1 + $0x1d8] sm:$0xff]
  %v81 = vld [vmem:[%s1 + $0x1e0] sm:$0xff]
  %v82 = vld [vmem:[%s1 + $0x1e8] sm:$0xff]
  %v83 = vld [vmem:[%s1 + $0x1f0] sm:$0xff]
  %v84 = vld [vmem:[%s1 + $0x1f8] sm:$0xff]
  %v85 = vld [vmem:[%s2] sm:$0xf]
  %v87 = vperm.slane %v85, 0
  %v88 = vperm.slane %v85, 1
  %v89 = vperm.slane %v85, 2
  %v90 = vperm.slane %v85, 3
  %95 = vmatpush.msra.mxu0 %v81
  %96 = vmatpush.msra.mxu0 %v77
  %97 = vmatpush.msra.mxu0 %v73
  %98 = vmatpush.msra.mxu0 %v69
  %99 = vmatpush.msra.mxu0 %v65
  %100 = vmatpush.msra.mxu0 %v61
  %101 = vmatpush.msra.mxu0 %v57
  %102 = vmatpush.msra.mxu0 %v53
  %103 = vmatpush.msra.mxu0 %v49
  %104 = vmatpush.msra.mxu0 %v45
  %105 = vmatpush.msra.mxu0 %v41
  %106 = vmatpush.msra.mxu0 %v37
  %107 = vmatpush.msra.mxu0 %v33
  %108 = vmatpush.msra.mxu0 %v29
  %109 = vmatpush.msra.mxu0 %v25
  %110 = vmatpush.msra.mxu0 %v21
  %111 = vmatmul.f32.gmra.mxu0 %v20
  %v112 = vpop.f32.mrf.mxu0
  %v113 = vadd.f32 %v87, %v112
  %114 = vdwg.mxu0
  %115 = vmatpush.msra.mxu0 %v82
  %116 = vmatpush.msra.mxu0 %v78
  %117 = vmatpush.msra.mxu0 %v74
  %118 = vmatpush.msra.mxu0 %v70
  %119 = vmatpush.msra.mxu0 %v66
  %120 = vmatpush.msra.mxu0 %v62
  %121 = vmatpush.msra.mxu0 %v58
  %122 = vmatpush.msra.mxu0 %v54
  %123 = vmatpush.msra.mxu0 %v50
  %124 = vmatpush.msra.mxu0 %v46
  %125 = vmatpush.msra.mxu0 %v42
  %126 = vmatpush.msra.mxu0 %v38
  %127 = vmatpush.msra.mxu0 %v34
  %128 = vmatpush.msra.mxu0 %v30
  %129 = vmatpush.msra.mxu0 %v26
  %130 = vmatpush.msra.mxu0 %v22
  %131 = vmatmul.f32.gmra.mxu0 %v20
  %v132 = vpop.f32.mrf.mxu0
  %v133 = vadd.f32 %v88, %v132
  %134 = vdwg.mxu0
  %135 = vmatpush.msra.mxu0 %v83
  %136 = vmatpush.msra.mxu0 %v79
  %137 = vmatpush.msra.mxu0 %v75
  %138 = vmatpush.msra.mxu0 %v71
  %139 = vmatpush.msra.mxu0 %v67
  %140 = vmatpush.msra.mxu0 %v63
  %141 = vmatpush.msra.mxu0 %v59
  %142 = vmatpush.msra.mxu0 %v55
  %143 = vmatpush.msra.mxu0 %v51
  %144 = vmatpush.msra.mxu0 %v47
  %145 = vmatpush.msra.mxu0 %v43
  %146 = vmatpush.msra.mxu0 %v39
  %147 = vmatpush.msra.mxu0 %v35
  %148 = vmatpush.msra.mxu0 %v31
  %149 = vmatpush.msra.mxu0 %v27
  %150 = vmatpush.msra.mxu0 %v23
  %151 = vmatmul.f32.gmra.mxu0 %v20
  %v152 = vpop.f32.mrf.mxu0
  %v153 = vadd.f32 %v89, %v152
  %154 = vdwg.mxu0
  %155 = vmatpush.msra.mxu0 %v84
  %156 = vmatpush.msra.mxu0 %v80
  %157 = vmatpush.msra.mxu0 %v76
  %158 = vmatpush.msra.mxu0 %v72
  %159 = vmatpush.msra.mxu0 %v68
  %160 = vmatpush.msra.mxu0 %v64
  %161 = vmatpush.msra.mxu0 %v60
  %162 = vmatpush.msra.mxu0 %v56
  %163 = vmatpush.msra.mxu0 %v52
  %164 = vmatpush.msra.mxu0 %v48
  %165 = vmatpush.msra.mxu0 %v44
  %166 = vmatpush.msra.mxu0 %v40
  %167 = vmatpush.msra.mxu0 %v36
  %168 = vmatpush.msra.mxu0 %v32
  %169 = vmatpush.msra.mxu0 %v28
  %170 = vmatpush.msra.mxu0 %v24
  %171 = vmatmul.f32.gmra.mxu0 %v20
  %v172 = vpop.f32.mrf.mxu0
  %v173 = vadd.f32 %v90, %v172
  %174 = vdwg.mxu0
  %v175 = vmax.f32 %v113, 0.0
  %v176 = vmax.f32 %v133, 0.0
  %v177 = vmax.f32 %v153, 0.0
  %v178 = vmax.f32 %v173, 0.0
  %v179 = vld [vmem:[%s3] sm:$0xff]
  %v180 = vld [vmem:[%s3 + $0x8] sm:$0xff]
  %v181 = vld [vmem:[%s3 + $0x10] sm:$0xff]
  %v182 = vld [vmem:[%s3 + $0x18] sm:$0xff]
  %v183 = vld [vmem:[%s3 + $0x20] sm:$0xff]
  %v184 = vld [vmem:[%s3 + $0x28] sm:$0xff]
  %v185 = vld [vmem:[%s3 + $0x30] sm:$0xff]
  %v186 = vld [vmem:[%s3 + $0x38] sm:$0xff]
  %v187 = vld [vmem:[%s3 + $0x40] sm:$0xff]
  %v188 = vld [vmem:[%s3 + $0x48] sm:$0xff]
  %v189 = vld [vmem:[%s3 + $0x50] sm:$0xff]
  %v190 = vld [vmem:[%s3 + $0x58] sm:$0xff]
  %v191 = vld [vmem:[%s3 + $0x60] sm:$0xff]
  %v192 = vld [vmem:[%s3 + $0x68] sm:$0xff]
  %v193 = vld [vmem:[%s3 + $0x70] sm:$0xff]
  %v194 = vld [vmem:[%s3 + $0x78] sm:$0xff]
  %v195 = vld [vmem:[%s3 + $0x80] sm:$0xff]
  %v196 = vld [vmem:[%s3 + $0x88] sm:$0xff]
  %v197 = vld [vmem:[%s3 + $0x90] sm:$0xff]
  %v198 = vld [vmem:[%s3 + $0x98] sm:$0xff]
  %v199 = vld [vmem:[%s3 + $0xa0] sm:$0xff]
  %v200 = vld [vmem:[%s3 + $0xa8] sm:$0xff]
  %v201 = vld [vmem:[%s3 + $0xb0] sm:$0xff]
  %v202 = vld [vmem:[%s3 + $0xb8] sm:$0xff]
  %v203 = vld [vmem:[%s3 + $0xc0] sm:$0xff]
  %v204 = vld [vmem:[%s3 + $0xc8] sm:$0xff]
  %v205 = vld [vmem:[%s3 + $0xd0] sm:$0xff]
  %v206 = vld [vmem:[%s3 + $0xd8] sm:$0xff]
  %v207 = vld [vmem:[%s3 + $0xe0] sm:$0xff]
  %v208 = vld [vmem:[%s3 + $0xe8] sm:$0xff]
  %v209 = vld [vmem:[%s3 + $0xf0] sm:$0xff]
  %v210 = vld [vmem:[%s3 + $0xf8] sm:$0xff]
  %v211 = vld [vmem:[%s3 + $0x100] sm:$0xff]
  %v212 = vld [vmem:[%s3 + $0x108] sm:$0xff]
  %v213 = vld [vmem:[%s3 + $0x110] sm:$0xff]
  %v214 = vld [vmem:[%s3 + $0x118] sm:$0xff]
  %v215 = vld [vmem:[%s3 + $0x120] sm:$0xff]
  %v216 = vld [vmem:[%s3 + $0x128] sm:$0xff]
  %v217 = vld [vmem:[%s3 + $0x130] sm:$0xff]
  %v218 = vld [vmem:[%s3 + $0x138] sm:$0xff]
  %v219 = vld [vmem:[%s3 + $0x140] sm:$0xff]
  %v220 = vld [vmem:[%s3 + $0x148] sm:$0xff]
  %v221 = vld [vmem:[%s3 + $0x150] sm:$0xff]
  %v222 = vld [vmem:[%s3 + $0x158] sm:$0xff]
  %v223 = vld [vmem:[%s3 + $0x160] sm:$0xff]
  %v224 = vld [vmem:[%s3 + $0x168] sm:$0xff]
  %v225 = vld [vmem:[%s3 + $0x170] sm:$0xff]
  %v226 = vld [vmem:[%s3 + $0x178] sm:$0xff]
  %v227 = vld [vmem:[%s3 + $0x180] sm:$0xff]
  %v228 = vld [vmem:[%s3 + $0x188] sm:$0xff]
  %v229 = vld [vmem:[%s3 + $0x190] sm:$0xff]
  %v230 = vld [vmem:[%s3 + $0x198] sm:$0xff]
  %v231 = vld [vmem:[%s3 + $0x1a0] sm:$0xff]
  %v232 = vld [vmem:[%s3 + $0x1a8] sm:$0xff]
  %v233 = vld [vmem:[%s3 + $0x1b0] sm:$0xff]
  %v234 = vld [vmem:[%s3 + $0x1b8] sm:$0xff]
  %v235 = vld [vmem:[%s3 + $0x1c0] sm:$0xff]
  %v236 = vld [vmem:[%s3 + $0x1c8] sm:$0xff]
  %v237 = vld [vmem:[%s3 + $0x1d0] sm:$0xff]
  %v238 = vld [vmem:[%s3 + $0x1d8] sm:$0xff]
  %v239 = vld [vmem:[%s3 + $0x1e0] sm:$0xff]
  %v240 = vld [vmem:[%s3 + $0x1e8] sm:$0xff]
  %v241 = vld [vmem:[%s3 + $0x1f0] sm:$0xff]
  %v242 = vld [vmem:[%s3 + $0x1f8] sm:$0xff]
  %v243 = vld [vmem:[%s4] sm:$0x1]
  %v245 = vperm.slane %v243, 0
  %247 = vmatpush.msra.mxu0 %v194
  %248 = vmatpush.msra.mxu0 %v193
  %249 = vmatpush.msra.mxu0 %v192
  %250 = vmatpush.msra.mxu0 %v191
  %251 = vmatpush.msra.mxu0 %v190
  %252 = vmatpush.msra.mxu0 %v189
  %253 = vmatpush.msra.mxu0 %v188
  %254 = vmatpush.msra.mxu0 %v187
  %255 = vmatpush.msra.mxu0 %v186
  %256 = vmatpush.msra.mxu0 %v185
  %257 = vmatpush.msra.mxu0 %v184
  %258 = vmatpush.msra.mxu0 %v183
  %259 = vmatpush.msra.mxu0 %v182
  %260 = vmatpush.msra.mxu0 %v181
  %261 = vmatpush.msra.mxu0 %v180
  %262 = vmatpush.msra.mxu0 %v179
  %263 = vmatmul.f32.gmra.mxu0 %v175
  %v264 = vpop.f32.mrf.mxu0
  %v265 = vadd.f32 %v245, %v264
  %266 = vdwg.mxu0
  %267 = vmatpush.msra.mxu0 %v210
  %268 = vmatpush.msra.mxu0 %v209
  %269 = vmatpush.msra.mxu0 %v208
  %270 = vmatpush.msra.mxu0 %v207
  %271 = vmatpush.msra.mxu0 %v206
  %272 = vmatpush.msra.mxu0 %v205
  %273 = vmatpush.msra.mxu0 %v204
  %274 = vmatpush.msra.mxu0 %v203
  %275 = vmatpush.msra.mxu0 %v202
  %276 = vmatpush.msra.mxu0 %v201
  %277 = vmatpush.msra.mxu0 %v200
  %278 = vmatpush.msra.mxu0 %v199
  %279 = vmatpush.msra.mxu0 %v198
  %280 = vmatpush.msra.mxu0 %v197
  %281 = vmatpush.msra.mxu0 %v196
  %282 = vmatpush.msra.mxu0 %v195
  %283 = vmatmul.f32.gmra.mxu0 %v176
  %v284 = vpop.f32.mrf.mxu0
  %v285 = vadd.f32 %v265, %v284
  %286 = vdwg.mxu0
  %287 = vmatpush.msra.mxu0 %v226
  %288 = vmatpush.msra.mxu0 %v225
  %289 = vmatpush.msra.mxu0 %v224
  %290 = vmatpush.msra.mxu0 %v223
  %291 = vmatpush.msra.mxu0 %v222
  %292 = vmatpush.msra.mxu0 %v221
  %293 = vmatpush.msra.mxu0 %v220
  %294 = vmatpush.msra.mxu0 %v219
  %295 = vmatpush.msra.mxu0 %v218
  %296 = vmatpush.msra.mxu0 %v217
  %297 = vmatpush.msra.mxu0 %v216
  %298 = vmatpush.msra.mxu0 %v215
  %299 = vmatpush.msra.mxu0 %v214
  %300 = vmatpush.msra.mxu0 %v213
  %301 = vmatpush.msra.mxu0 %v212
  %302 = vmatpush.msra.mxu0 %v211
  %303 = vmatmul.f32.gmra.mxu0 %v177
  %v304 = vpop.f32.mrf.mxu0
  %v305 = vadd.f32 %v285, %v304
  %306 = vdwg.mxu0
  %307 = vmatpush.msra.mxu0 %v242
  %308 = vmatpush.msra.mxu0 %v241
  %309 = vmatpush.msra.mxu0 %v240
  %310 = vmatpush.msra.mxu0 %v239
  %311 = vmatpush.msra.mxu0 %v238
  %312 = vmatpush.msra.mxu0 %v237
  %313 = vmatpush.msra.mxu0 %v236
  %314 = vmatpush.msra.mxu0 %v235
  %315 = vmatpush.msra.mxu0 %v234
  %316 = vmatpush.msra.mxu0 %v233
  %317 = vmatpush.msra.mxu0 %v232
  %318 = vmatpush.msra.mxu0 %v231
  %319 = vmatpush.msra.mxu0 %v230
  %320 = vmatpush.msra.mxu0 %v229
  %321 = vmatpush.msra.mxu0 %v228
  %322 = vmatpush.msra.mxu0 %v227
  %323 = vmatmul.f32.gmra.mxu0 %v178
  %v324 = vpop.f32.mrf.mxu0
  %v325 = vadd.f32 %v305, %v324
  %326 = vdwg.mxu0
  %327 = vst [vmem:[%s5] sm:$0xff] %v325
  // Predicated region
  $region22: #{mlp_pallas.1} parent=0 // pred_check
    _
  $region23: #{mlp_pallas.1} parent=0 // pred_check_branch
    %329 = sbr.rel (0) target = $region25
  $region24: #{mlp_pallas.1} parent=0 // pred_region
    _
  $region25: #{mlp_pallas.1} parent=0 // pred_fallthru
    _
  // Predicated region
  $region26: #{mlp_pallas.1} parent=0 // pred_check
    _
  $region27: #{mlp_pallas.1} parent=0 // pred_check_branch
    %331 = sbr.rel (0) target = $region29
  $region28: #{mlp_pallas.1} parent=0 // pred_region
    _
  $region29: #{mlp_pallas.1} parent=0 // pred_fallthru
    _

</llo_original>
